<compile_context>
chip_gen: v7x
topology: tpu7x:2x2x1
jax: 0.10.0
libtpu: 0.0.40
codegen_flags: <defaults>
</compile_context>

<pallas_src>
import jax
import jax.numpy as jnp
from jax.experimental import pallas as pl
from jax.experimental.pallas import tpu as pltpu


HIDDEN = 64        # hp.hidden
MAX_TM = 2048      # max batch-tile rows (multiple of 8)


def _round_up(n, m):
    return ((n + m - 1) // m) * m


def actor_kernel(x_ref, w1_ref, b1_ref, w2_ref, b2_ref, w3_ref, b3_ref, mu_ref):
    # fc1 + tanh
    h1 = jnp.tanh(
        jnp.dot(x_ref[...], w1_ref[...], preferred_element_type=jnp.float32)
        + b1_ref[...]
    )
    # fc2 + tanh
    h2 = jnp.tanh(
        jnp.dot(h1, w2_ref[...], preferred_element_type=jnp.float32) + b2_ref[...]
    )
    # fc3 (mu head) -- true-width (tm, num_outputs) store
    mu_ref[...] = (
        jnp.dot(h2, w3_ref[...], preferred_element_type=jnp.float32) + b3_ref[...]
    )


def init_actor_params(key, num_inputs, num_outputs, hidden=HIDDEN):
    """PyTorch nn.Linear default init (U[-1/sqrt(fan_in), +1/sqrt(fan_in)]),
    fc3 weight scaled by 0.1 and fc3 bias zeroed, as in the module.

    Weights are stored pre-transposed as (in, out) == W^T. No lane padding:
    the kernel consumes/produces true feature widths."""
    k1, k2, k3, k4, k5, k6 = jax.random.split(key, 6)

    def linear(kw, kb, fan_in, fan_out):
        bound = 1.0 / jnp.sqrt(fan_in)
        w = jax.random.uniform(kw, (fan_in, fan_out), jnp.float32, -bound, bound)
        b = jax.random.uniform(kb, (1, fan_out), jnp.float32, -bound, bound)
        return w, b

    w1, b1 = linear(k1, k2, num_inputs, hidden)
    w2, b2 = linear(k3, k4, hidden, hidden)
    w3, b3 = linear(k5, k6, hidden, num_outputs)
    w3 = w3 * 0.1                      # fc3.weight.data.mul_(0.1)
    b3 = jnp.zeros_like(b3)            # fc3.bias.data.mul_(0.0)

    meta = dict(num_inputs=num_inputs, num_outputs=num_outputs, hidden=hidden)
    return (w1, b1, w2, b2, w3, b3), meta


def _choose_batch_tile(batch):
    """Pick (tm, batch_pad).

    * At least 2 grid steps when the batch is splittable (batch >= 16) so the
      "parallel" batch axis can shard across the 2 TensorCores on v7x.
    * tm = round_up(cdiv(batch, steps), 8): at most 7 padded rows per step.
    * tm capped by MAX_TM via the steps computation.
    """
    min_steps = 2 if batch >= 16 else 1
    steps = max(min_steps, pl.cdiv(batch, MAX_TM))
    tm = _round_up(pl.cdiv(batch, steps), 8)
    return tm, steps * tm


def actor_forward(x, params, meta):
    w1, b1, w2, b2, w3, b3 = params
    batch = x.shape[0]
    num_inputs = meta["num_inputs"]
    num_outputs = meta["num_outputs"]
    hidden = meta["hidden"]

    tm, batch_pad = _choose_batch_tile(batch)

    # Only batch (sublane) padding; feature width stays at num_inputs.
    x_p = x.astype(jnp.float32)
    if batch_pad != batch:
        x_p = jnp.pad(x_p, ((0, batch_pad - batch), (0, 0)))

    grid = (batch_pad // tm,)

    mu_pad = pl.pallas_call(
        actor_kernel,
        out_shape=jax.ShapeDtypeStruct((batch_pad, num_outputs), jnp.float32),
        grid=grid,
        in_specs=[
            # x tile: (tm, num_inputs) — last dim equals full array dim.
            pl.BlockSpec((tm, num_inputs), lambda i: (i, 0)),
            # Weights/biases: constant block index -> DMA'd once, VMEM-resident.
            pl.BlockSpec((num_inputs, hidden), lambda i: (0, 0)),   # W1
            pl.BlockSpec((1, hidden), lambda i: (0, 0)),            # b1
            pl.BlockSpec((hidden, hidden), lambda i: (0, 0)),       # W2
            pl.BlockSpec((1, hidden), lambda i: (0, 0)),            # b2
            pl.BlockSpec((hidden, num_outputs), lambda i: (0, 0)),  # W3
            pl.BlockSpec((1, num_outputs), lambda i: (0, 0)),       # b3
        ],
        out_specs=pl.BlockSpec((tm, num_outputs), lambda i: (i, 0)),  # mu tile
        compiler_params=pltpu.CompilerParams(
            dimension_semantics=("parallel",),   # v7x: shard batch over 2 TCs
        ),
    )(x_p, w1, b1, w2, b2, w3, b3)

    mu = mu_pad[:batch] if batch_pad != batch else mu_pad
    # logstd/std are compile-time constants -> build outside the kernel.
    logstd = jnp.zeros_like(mu)
    std = jnp.ones_like(mu)
    return mu, std, logstd


if __name__ == "__main__":
    # Small MuJoCo-like shapes: batch=8 states, obs dim=16, action dim=6.
    batch, num_inputs, num_outputs = 8, 16, 6

    key = jax.random.PRNGKey(0)
    kx, kp = jax.random.split(key)
    x = jax.random.normal(kx, (batch, num_inputs), dtype=jnp.float32)
    params, meta = init_actor_params(kp, num_inputs, num_outputs)

    mu, std, logstd = actor_forward(x, params, meta)
    jax.block_until_ready((mu, std, logstd))

    # Reference check in plain JAX.
    w1, b1, w2, b2, w3, b3 = params
    h1 = jnp.tanh(x @ w1 + b1)
    h2 = jnp.tanh(h1 @ w2 + b2)
    mu_ref = h2 @ w3 + b3

    assert mu.shape == (batch, num_outputs)
    assert jnp.allclose(mu, mu_ref, atol=1e-5), "mu mismatch"
    assert jnp.allclose(std, jnp.ones_like(mu_ref)), "std mismatch"
    assert jnp.allclose(logstd, jnp.zeros_like(mu_ref)), "logstd mismatch"

    # Exercise a ragged, multi-step batch path too (2 grid steps, 7 padded rows).
    batch2 = 521
    x2 = jax.random.normal(jax.random.PRNGKey(1), (batch2, num_inputs), jnp.float32)
    mu2, _, _ = actor_forward(x2, params, meta)
    jax.block_until_ready(mu2)
    mu2_ref = jnp.tanh(jnp.tanh(x2 @ w1 + b1) @ w2 + b2) @ w3 + b3
    assert mu2.shape == (batch2, num_outputs)
    assert jnp.allclose(mu2, mu2_ref, atol=1e-5), "mu mismatch (ragged batch)"

    print("KERNEL_OK")
</pallas_src>

<mosaic_0001>
module attributes {stable_mosaic.version = 11 : i64} {
  func.func @actor_kernel(%arg0: i32, %arg1: memref<8x16xf32, #tpu.memory_space<vmem>>, %arg2: memref<16x64xf32, #tpu.memory_space<vmem>>, %arg3: memref<1x64xf32, #tpu.memory_space<vmem>>, %arg4: memref<64x64xf32, #tpu.memory_space<vmem>>, %arg5: memref<1x64xf32, #tpu.memory_space<vmem>>, %arg6: memref<64x6xf32, #tpu.memory_space<vmem>>, %arg7: memref<1x6xf32, #tpu.memory_space<vmem>>, %arg8: memref<8x6xf32, #tpu.memory_space<vmem>>) attributes {dimension_semantics = [#tpu.dimension_semantics<parallel>], iteration_bounds = array<i64: 1>, scalar_prefetch = 0 : i64, scratch_operands = 0 : i64, tpu.core_type = #tpu.core_type<tc>, window_params = [{transform_indices = @transform_0, window_bounds = array<i64: 8, 16>}, {pipeline_mode = #tpu.pipeline_mode<synchronous>, transform_indices = @transform_1, window_bounds = array<i64: 16, 64>}, {pipeline_mode = #tpu.pipeline_mode<synchronous>, transform_indices = @transform_2, window_bounds = array<i64: 1, 64>}, {pipeline_mode = #tpu.pipeline_mode<synchronous>, transform_indices = @transform_3, window_bounds = array<i64: 64, 64>}, {pipeline_mode = #tpu.pipeline_mode<synchronous>, transform_indices = @transform_4, window_bounds = array<i64: 1, 64>}, {pipeline_mode = #tpu.pipeline_mode<synchronous>, transform_indices = @transform_5, window_bounds = array<i64: 64, 6>}, {pipeline_mode = #tpu.pipeline_mode<synchronous>, transform_indices = @transform_6, window_bounds = array<i64: 1, 6>}, {transform_indices = @transform_7, window_bounds = array<i64: 8, 6>}]} {
    %c0 = arith.constant 0 : index
    %c0_0 = arith.constant 0 : index
    %0 = vector.load %arg1[%c0, %c0_0] : memref<8x16xf32, #tpu.memory_space<vmem>>, vector<8x16xf32>
    %c0_1 = arith.constant 0 : index
    %c0_2 = arith.constant 0 : index
    %1 = vector.load %arg2[%c0_1, %c0_2] : memref<16x64xf32, #tpu.memory_space<vmem>>, vector<16x64xf32>
    %cst = arith.constant dense<0.000000e+00> : vector<8x64xf32>
    %2 = tpu.matmul %0, %1, %cst {dimension_numbers = #tpu.dot_dimension_numbers<[1], [0], [0], [1], [0, 0, 1, 1], [], []>} : vector<8x16xf32>, vector<16x64xf32>, vector<8x64xf32> -> vector<8x64xf32>
    %c0_3 = arith.constant 0 : index
    %c0_4 = arith.constant 0 : index
    %3 = vector.load %arg3[%c0_3, %c0_4] : memref<1x64xf32, #tpu.memory_space<vmem>>, vector<1x64xf32>
    %4 = vector.broadcast %3 : vector<1x64xf32> to vector<8x64xf32>
    %5 = arith.addf %2, %4 : vector<8x64xf32>
    %6 = math.tanh %5 : vector<8x64xf32>
    %c0_5 = arith.constant 0 : index
    %c0_6 = arith.constant 0 : index
    %7 = vector.load %arg4[%c0_5, %c0_6] : memref<64x64xf32, #tpu.memory_space<vmem>>, vector<64x64xf32>
    %cst_7 = arith.constant dense<0.000000e+00> : vector<8x64xf32>
    %8 = tpu.matmul %6, %7, %cst_7 {dimension_numbers = #tpu.dot_dimension_numbers<[1], [0], [0], [1], [0, 0, 1, 1], [], []>} : vector<8x64xf32>, vector<64x64xf32>, vector<8x64xf32> -> vector<8x64xf32>
    %c0_8 = arith.constant 0 : index
    %c0_9 = arith.constant 0 : index
    %9 = vector.load %arg5[%c0_8, %c0_9] : memref<1x64xf32, #tpu.memory_space<vmem>>, vector<1x64xf32>
    %10 = vector.broadcast %9 : vector<1x64xf32> to vector<8x64xf32>
    %11 = arith.addf %8, %10 : vector<8x64xf32>
    %12 = math.tanh %11 : vector<8x64xf32>
    %c0_10 = arith.constant 0 : index
    %c0_11 = arith.constant 0 : index
    %13 = vector.load %arg6[%c0_10, %c0_11] : memref<64x6xf32, #tpu.memory_space<vmem>>, vector<64x6xf32>
    %cst_12 = arith.constant dense<0.000000e+00> : vector<8x6xf32>
    %14 = tpu.matmul %12, %13, %cst_12 {dimension_numbers = #tpu.dot_dimension_numbers<[1], [0], [0], [1], [0, 0, 1, 1], [], []>} : vector<8x64xf32>, vector<64x6xf32>, vector<8x6xf32> -> vector<8x6xf32>
    %c0_13 = arith.constant 0 : index
    %c0_14 = arith.constant 0 : index
    %15 = vector.load %arg7[%c0_13, %c0_14] : memref<1x6xf32, #tpu.memory_space<vmem>>, vector<1x6xf32>
    %16 = vector.broadcast %15 : vector<1x6xf32> to vector<8x6xf32>
    %17 = arith.addf %14, %16 : vector<8x6xf32>
    %c0_15 = arith.constant 0 : index
    %c0_16 = arith.constant 0 : index
    %18 = vector.load %arg8[%c0_15, %c0_16] : memref<8x6xf32, #tpu.memory_space<vmem>>, vector<8x6xf32>
    tpu.vector_store %arg8[%c0_15, %c0_16], %17 {strides = array<i32>} : memref<8x6xf32, #tpu.memory_space<vmem>>, vector<8x6xf32>,
    return
  }
  func.func @transform_0(%arg0: i32) -> (i32, i32) {
    %c0_i32 = arith.constant 0 : i32
    %c0_i32_0 = arith.constant 0 : i32
    return %arg0, %c0_i32 : i32, i32
  }
  func.func @transform_1(%arg0: i32) -> (i32, i32) {
    %c0_i32 = arith.constant 0 : i32
    %c0_i32_0 = arith.constant 0 : i32
    %c0_i32_1 = arith.constant 0 : i32
    return %c0_i32, %c0_i32_0 : i32, i32
  }
  func.func @transform_2(%arg0: i32) -> (i32, i32) {
    %c0_i32 = arith.constant 0 : i32
    %c0_i32_0 = arith.constant 0 : i32
    %c0_i32_1 = arith.constant 0 : i32
    return %c0_i32, %c0_i32_0 : i32, i32
  }
  func.func @transform_3(%arg0: i32) -> (i32, i32) {
    %c0_i32 = arith.constant 0 : i32
    %c0_i32_0 = arith.constant 0 : i32
    %c0_i32_1 = arith.constant 0 : i32
    return %c0_i32, %c0_i32_0 : i32, i32
  }
  func.func @transform_4(%arg0: i32) -> (i32, i32) {
    %c0_i32 = arith.constant 0 : i32
    %c0_i32_0 = arith.constant 0 : i32
    %c0_i32_1 = arith.constant 0 : i32
    return %c0_i32, %c0_i32_0 : i32, i32
  }
  func.func @transform_5(%arg0: i32) -> (i32, i32) {
    %c0_i32 = arith.constant 0 : i32
    %c0_i32_0 = arith.constant 0 : i32
    %c0_i32_1 = arith.constant 0 : i32
    return %c0_i32, %c0_i32_0 : i32, i32
  }
  func.func @transform_6(%arg0: i32) -> (i32, i32) {
    %c0_i32 = arith.constant 0 : i32
    %c0_i32_0 = arith.constant 0 : i32
    %c0_i32_1 = arith.constant 0 : i32
    return %c0_i32, %c0_i32_0 : i32, i32
  }
  func.func @transform_7(%arg0: i32) -> (i32, i32) {
    %c0_i32 = arith.constant 0 : i32
    %c0_i32_0 = arith.constant 0 : i32
    return %arg0, %c0_i32 : i32, i32
  }
}

</mosaic_0001>

<llo_original>
// kernel: tpu_custom_call.1
$region0: #{tpu_custom_call.1}
  #allocation0 [shape = 'u32[]', space=smem, size = 0x4, offset = 0x4, fixed_abs, tag = 'smem constant byte address 0x4 - core index']
  #allocation1 [shape = 'u32[144,128]{1,0:T(1,128)}', space=vmem, size = 0x12000, scoped, tag = 'internal scratch']
  %s0 = inlined_call_operand.hbm [shape: f32[8,16], index: 0, kind: input, shape index: {}]
  %s1 = inlined_call_operand.vmem [shape: f32[16,64], index: 1, kind: input, shape index: {}]
  %s2 = inlined_call_operand.vmem [shape: f32[1,64], index: 2, kind: input, shape index: {}]
  %s3 = inlined_call_operand.vmem [shape: f32[64,64], index: 3, kind: input, shape index: {}]
  %s4 = inlined_call_operand.vmem [shape: f32[1,64], index: 4, kind: input, shape index: {}]
  %s5 = inlined_call_operand.vmem [shape: f32[64,6], index: 5, kind: input, shape index: {}]
  %s6 = inlined_call_operand.vmem [shape: f32[1,6], index: 6, kind: input, shape index: {}]
  %s7 = inlined_call_operand.hbm [shape: f32[8,6], index: 7, kind: output, shape index: {}]
  %s8 = sld [smem:[#allocation0]]
  $region42: #{tpu_custom_call.1} parent=0
    _
  %s10 = ssub.s32 1, %s8
  %s11 = scalar_select 0, %s10, %s8
  $region1: #{tpu_custom_call.1} parent=0
    #allocation2 [shape = 'u8[4096]{0}', space=vmem, size = 0x1000, scoped, tag = 'input window, operand 0, single buffered']
    #allocation3 [shape = 's32[1]{0}', space=sflag, size = 0x4, scoped, tag = 'scoped memory for tpu_custom_call.1']
    #allocation4 [shape = 's32[1]{0}', space=sflag, size = 0x4, scoped, tag = 'scoped memory for tpu_custom_call.1']
    #allocation5 [shape = 'u8[4096]{0}', space=vmem, size = 0x1000, scoped, tag = 'output window, operand 0, single buffered']
    %12 = vsyncpa [#allocation3], 0
    %13 = vsyncpa [#allocation4], 0
    // Predicated region
    $region2: #{tpu_custom_call.1} parent=1 // pred_check
      _
    $region3: #{tpu_custom_call.1} parent=1 // pred_check_branch
      %15 = sbr.rel (0) target = $region5
    $region4: #{tpu_custom_call.1} parent=1 // pred_region
      %s17 = ssub.s32 128, 128
      %18 = vsyncadd [#allocation3], %s17
      %s20 = sshll.u32 [#allocation2], 4
      %s21 = int_to_ptr.vmem [resolvable:$true] %s20
      %23 = dma.hbm_to_vmem [thread:$0]  %s0, 128, %s21, [#allocation3]
    $region5: #{tpu_custom_call.1} parent=1 // pred_fallthru
      _
    // Predicated region
    $region6: #{tpu_custom_call.1} parent=1 // pred_check
      _
    $region7: #{tpu_custom_call.1} parent=1 // pred_check_branch
      %25 = sbr.rel (0) target = $region9
    $region8: #{tpu_custom_call.1} parent=1 // pred_region
      _
    $region9: #{tpu_custom_call.1} parent=1 // pred_fallthru
      _
    // Predicated region
    $region10: #{tpu_custom_call.1} parent=1 // pred_check
      _
    $region11: #{tpu_custom_call.1} parent=1 // pred_check_branch
      %27 = sbr.rel (0) target = $region13
    $region12: #{tpu_custom_call.1} parent=1 // pred_region
      _
    $region13: #{tpu_custom_call.1} parent=1 // pred_fallthru
      _
    // Predicated region
    $region14: #{tpu_custom_call.1} parent=1 // pred_check
      _
    $region15: #{tpu_custom_call.1} parent=1 // pred_check_branch
      %29 = sbr.rel (0) target = $region17
    $region16: #{tpu_custom_call.1} parent=1 // pred_region
      _
    $region17: #{tpu_custom_call.1} parent=1 // pred_fallthru
      _
    // Predicated region
    $region18: #{tpu_custom_call.1} parent=1 // pred_check
      _
    $region19: #{tpu_custom_call.1} parent=1 // pred_check_branch
      %31 = sbr.rel (0) target = $region21
    $region20: #{tpu_custom_call.1} parent=1 // pred_region
      _
    $region21: #{tpu_custom_call.1} parent=1 // pred_fallthru
      _
    // Predicated region
    $region22: #{tpu_custom_call.1} parent=1 // pred_check
      _
    $region23: #{tpu_custom_call.1} parent=1 // pred_check_branch
      %33 = sbr.rel (0) target = $region25
    $region24: #{tpu_custom_call.1} parent=1 // pred_region
      _
    $region25: #{tpu_custom_call.1} parent=1 // pred_fallthru
      _
    // Predicated region
    $region26: #{tpu_custom_call.1} parent=1 // pred_check
      _
    $region27: #{tpu_custom_call.1} parent=1 // pred_check_branch
      %35 = sbr.rel (0) target = $region29
    $region28: #{tpu_custom_call.1} parent=1 // pred_region
      _
    $region29: #{tpu_custom_call.1} parent=1 // pred_fallthru
      _
    // Predicated region
    $region30: #{tpu_custom_call.1} parent=1 // pred_check
      _
    $region31: #{tpu_custom_call.1} parent=1 // pred_check_branch
      %37 = sbr.rel (0) target = $region33
    $region32: #{tpu_custom_call.1} parent=1 // pred_region
      %38 = dma.done [#allocation3], 128
    $region33: #{tpu_custom_call.1} parent=1 // pred_fallthru
      _
    %v39 = vld [vmem:[#allocation2] sm:$0xff]
    %v40 = vld [vmem:[%s1] sm:$0xff]
    %v41 = vld [vmem:[%s1 + $0x8] sm:$0xff]
    %v42 = vld [vmem:[%s2] sm:$0x1]
    %v44 = vlaneseq
    %v45 = vshrl.u32 %v44, 7
    %v46 = vsub.s32 0, %v45
    %v47 = vrot.slane %v42, %v46
    %vm49 = vcmask 130048
    %v51 = vsel %vm49, %v39, 0
    %53 = vmatprep.subr.mxu0 0.0
    %54 = vmatpush1.msra.mxu0 %v40
    %55 = vmatprep.subr.mxu0 0.0
    %56 = vmatpush1.msra.mxu0 %v41
    %57 = vmatprep.subr.mxu0 0.0
    %58 = vmatpush1.msra.mxu0 0.0
    %59 = vmatprep.subr.mxu0 0.0
    %60 = vmatpush1.msra.mxu0 0.0
    %61 = vmatprep.subr.mxu0 0.0
    %62 = vmatpush1.msra.mxu0 0.0
    %63 = vmatprep.subr.mxu0 0.0
    %64 = vmatpush1.msra.mxu0 0.0
    %65 = vmatprep.subr.mxu0 0.0
    %66 = vmatpush1.msra.mxu0 0.0
    %67 = vmatprep.subr.mxu0 0.0
    %68 = vmatpush1.msra.mxu0 0.0
    %69 = vmatprep.subr.mxu0 0.0
    %70 = vmatpush1.msra.mxu0 0.0
    %71 = vmatprep.subr.mxu0 0.0
    %72 = vmatpush1.msra.mxu0 0.0
    %73 = vmatprep.subr.mxu0 0.0
    %74 = vmatpush1.msra.mxu0 0.0
    %75 = vmatprep.subr.mxu0 0.0
    %76 = vmatpush1.msra.mxu0 0.0
    %77 = vmatprep.subr.mxu0 0.0
    %78 = vmatpush1.msra.mxu0 0.0
    %79 = vmatprep.subr.mxu0 0.0
    %80 = vmatpush1.msra.mxu0 0.0
    %81 = vmatprep.subr.mxu0 0.0
    %82 = vmatpush1.msra.mxu0 0.0
    %83 = vmatprep.subr.mxu0 0.0
    %84 = vmatpush1.msra.mxu0 0.0
    %85 = vmatprep.subr.mxu0 0.0
    %86 = vmatpush1.msra.mxu0 0.0
    %87 = vmatprep.subr.mxu0 0.0
    %88 = vmatpush1.msra.mxu0 0.0
    %89 = vmatprep.subr.mxu0 0.0
    %90 = vmatpush1.msra.mxu0 0.0
    %91 = vmatprep.subr.mxu0 0.0
    %92 = vmatpush1.msra.mxu0 0.0
    %93 = vmatprep.subr.mxu0 0.0
    %94 = vmatpush1.msra.mxu0 0.0
    %95 = vmatprep.subr.mxu0 0.0
    %96 = vmatpush1.msra.mxu0 0.0
    %97 = vmatprep.subr.mxu0 0.0
    %98 = vmatpush1.msra.mxu0 0.0
    %99 = vmatprep.subr.mxu0 0.0
    %100 = vmatpush1.msra.mxu0 0.0
    %101 = vmatprep.subr.mxu0 0.0
    %102 = vmatpush1.msra.mxu0 0.0
    %103 = vmatprep.subr.mxu0 0.0
    %104 = vmatpush1.msra.mxu0 0.0
    %105 = vmatprep.subr.mxu0 0.0
    %106 = vmatpush1.msra.mxu0 0.0
    %107 = vmatprep.subr.mxu0 0.0
    %108 = vmatpush1.msra.mxu0 0.0
    %109 = vmatprep.subr.mxu0 0.0
    %110 = vmatpush1.msra.mxu0 0.0
    %111 = vmatprep.subr.mxu0 0.0
    %112 = vmatpush1.msra.mxu0 0.0
    %113 = vmatprep.subr.mxu0 0.0
    %114 = vmatpush1.msra.mxu0 0.0
    %115 = vmatprep.subr.mxu0 0.0
    %116 = vmatpush1.msra.mxu0 0.0
    %117 = vmatprep.mubr.f32.mxu0 0.0
    %118 = vmatmul.mubr.f32.gmra.mrb[0].mxu0 %v51
    %v119 = vpop.f32.mrb[0].mxu0
    %v120 = vadd.f32 %v47, %v119
    %v121 = vpop.f32.mrb[0].mxu0
    %122 = vdwg.mxu0
    %v123 = vtanh.pop %v120
    %v124 = vld [vmem:[%s3] sm:$0xff]
    %v125 = vld [vmem:[%s3 + $0x8] sm:$0xff]
    %v126 = vld [vmem:[%s3 + $0x10] sm:$0xff]
    %v127 = vld [vmem:[%s3 + $0x18] sm:$0xff]
    %v128 = vld [vmem:[%s3 + $0x20] sm:$0xff]
    %v129 = vld [vmem:[%s3 + $0x28] sm:$0xff]
    %v130 = vld [vmem:[%s3 + $0x30] sm:$0xff]
    %v131 = vld [vmem:[%s3 + $0x38] sm:$0xff]
    %v132 = vld [vmem:[%s4] sm:$0x1]
    %v134 = vlaneseq
    %v135 = vshrl.u32 %v134, 7
    %v136 = vsub.s32 0, %v135
    %v137 = vrot.slane %v132, %v136
    %vm139 = vcmask 523264
    %v141 = vsel %vm139, %v123, 0
    %143 = vmatprep.subr.mxu0 0.0
    %144 = vmatpush1.msra.mxu0 %v124
    %145 = vmatprep.subr.mxu0 0.0
    %146 = vmatpush1.msra.mxu0 %v125
    %147 = vmatprep.subr.mxu0 0.0
    %148 = vmatpush1.msra.mxu0 %v126
    %149 = vmatprep.subr.mxu0 0.0
    %150 = vmatpush1.msra.mxu0 %v127
    %151 = vmatprep.subr.mxu0 0.0
    %152 = vmatpush1.msra.mxu0 %v128
    %153 = vmatprep.subr.mxu0 0.0
    %154 = vmatpush1.msra.mxu0 %v129
    %155 = vmatprep.subr.mxu0 0.0
    %156 = vmatpush1.msra.mxu0 %v130
    %157 = vmatprep.subr.mxu0 0.0
    %158 = vmatpush1.msra.mxu0 %v131
    %159 = vmatprep.subr.mxu0 0.0
    %160 = vmatpush1.msra.mxu0 0.0
    %161 = vmatprep.subr.mxu0 0.0
    %162 = vmatpush1.msra.mxu0 0.0
    %163 = vmatprep.subr.mxu0 0.0
    %164 = vmatpush1.msra.mxu0 0.0
    %165 = vmatprep.subr.mxu0 0.0
    %166 = vmatpush1.msra.mxu0 0.0
    %167 = vmatprep.subr.mxu0 0.0
    %168 = vmatpush1.msra.mxu0 0.0
    %169 = vmatprep.subr.mxu0 0.0
    %170 = vmatpush1.msra.mxu0 0.0
    %171 = vmatprep.subr.mxu0 0.0
    %172 = vmatpush1.msra.mxu0 0.0
    %173 = vmatprep.subr.mxu0 0.0
    %174 = vmatpush1.msra.mxu0 0.0
    %175 = vmatprep.subr.mxu0 0.0
    %176 = vmatpush1.msra.mxu0 0.0
    %177 = vmatprep.subr.mxu0 0.0
    %178 = vmatpush1.msra.mxu0 0.0
    %179 = vmatprep.subr.mxu0 0.0
    %180 = vmatpush1.msra.mxu0 0.0
    %181 = vmatprep.subr.mxu0 0.0
    %182 = vmatpush1.msra.mxu0 0.0
    %183 = vmatprep.subr.mxu0 0.0
    %184 = vmatpush1.msra.mxu0 0.0
    %185 = vmatprep.subr.mxu0 0.0
    %186 = vmatpush1.msra.mxu0 0.0
    %187 = vmatprep.subr.mxu0 0.0
    %188 = vmatpush1.msra.mxu0 0.0
    %189 = vmatprep.subr.mxu0 0.0
    %190 = vmatpush1.msra.mxu0 0.0
    %191 = vmatprep.subr.mxu0 0.0
    %192 = vmatpush1.msra.mxu0 0.0
    %193 = vmatprep.subr.mxu0 0.0
    %194 = vmatpush1.msra.mxu0 0.0
    %195 = vmatprep.subr.mxu0 0.0
    %196 = vmatpush1.msra.mxu0 0.0
    %197 = vmatprep.subr.mxu0 0.0
    %198 = vmatpush1.msra.mxu0 0.0
    %199 = vmatprep.subr.mxu0 0.0
    %200 = vmatpush1.msra.mxu0 0.0
    %201 = vmatprep.subr.mxu0 0.0
    %202 = vmatpush1.msra.mxu0 0.0
    %203 = vmatprep.subr.mxu0 0.0
    %204 = vmatpush1.msra.mxu0 0.0
    %205 = vmatprep.subr.mxu0 0.0
    %206 = vmatpush1.msra.mxu0 0.0
    %207 = vmatprep.mubr.f32.mxu0 0.0
    %208 = vmatmul.mubr.f32.gmra.mrb[0].mxu0 %v141
    %v209 = vpop.f32.mrb[0].mxu0
    %v210 = vadd.f32 %v137, %v209
    %v211 = vpop.f32.mrb[0].mxu0
    %212 = vdwg.mxu0
    %v213 = vtanh.pop %v210
    %v214 = vld [vmem:[%s5] sm:$0xff]
    %v215 = vld [vmem:[%s5 + $0x8] sm:$0xff]
    %v216 = vld [vmem:[%s5 + $0x10] sm:$0xff]
    %v217 = vld [vmem:[%s5 + $0x18] sm:$0xff]
    %v218 = vld [vmem:[%s5 + $0x20] sm:$0xff]
    %v219 = vld [vmem:[%s5 + $0x28] sm:$0xff]
    %v220 = vld [vmem:[%s5 + $0x30] sm:$0xff]
    %v221 = vld [vmem:[%s5 + $0x38] sm:$0xff]
    %v222 = vld [vmem:[%s6] sm:$0x1]
    %v224 = vlaneseq
    %v225 = vshrl.u32 %v224, 7
    %v226 = vsub.s32 0, %v225
    %v227 = vrot.slane %v222, %v226
    %v230 = vsel %vm139, %v213, 0
    %232 = vmatprep.subr.mxu0 0.0
    %233 = vmatpush1.msra.mxu0 %v214
    %234 = vmatprep.subr.mxu0 0.0
    %235 = vmatpush1.msra.mxu0 %v215
    %236 = vmatprep.subr.mxu0 0.0
    %237 = vmatpush1.msra.mxu0 %v216
    %238 = vmatprep.subr.mxu0 0.0
    %239 = vmatpush1.msra.mxu0 %v217
    %240 = vmatprep.subr.mxu0 0.0
    %241 = vmatpush1.msra.mxu0 %v218
    %242 = vmatprep.subr.mxu0 0.0
    %243 = vmatpush1.msra.mxu0 %v219
    %244 = vmatprep.subr.mxu0 0.0
    %245 = vmatpush1.msra.mxu0 %v220
    %246 = vmatprep.subr.mxu0 0.0
    %247 = vmatpush1.msra.mxu0 %v221
    %248 = vmatprep.subr.mxu0 0.0
    %249 = vmatpush1.msra.mxu0 0.0
    %250 = vmatprep.subr.mxu0 0.0
    %251 = vmatpush1.msra.mxu0 0.0
    %252 = vmatprep.subr.mxu0 0.0
    %253 = vmatpush1.msra.mxu0 0.0
    %254 = vmatprep.subr.mxu0 0.0
    %255 = vmatpush1.msra.mxu0 0.0
    %256 = vmatprep.subr.mxu0 0.0
    %257 = vmatpush1.msra.mxu0 0.0
    %258 = vmatprep.subr.mxu0 0.0
    %259 = vmatpush1.msra.mxu0 0.0
    %260 = vmatprep.subr.mxu0 0.0
    %261 = vmatpush1.msra.mxu0 0.0
    %262 = vmatprep.subr.mxu0 0.0
    %263 = vmatpush1.msra.mxu0 0.0
    %264 = vmatprep.subr.mxu0 0.0
    %265 = vmatpush1.msra.mxu0 0.0
    %266 = vmatprep.subr.mxu0 0.0
    %267 = vmatpush1.msra.mxu0 0.0
    %268 = vmatprep.subr.mxu0 0.0
    %269 = vmatpush1.msra.mxu0 0.0
    %270 = vmatprep.subr.mxu0 0.0
    %271 = vmatpush1.msra.mxu0 0.0
    %272 = vmatprep.subr.mxu0 0.0
    %273 = vmatpush1.msra.mxu0 0.0
    %274 = vmatprep.subr.mxu0 0.0
    %275 = vmatpush1.msra.mxu0 0.0
    %276 = vmatprep.subr.mxu0 0.0
    %277 = vmatpush1.msra.mxu0 0.0
    %278 = vmatprep.subr.mxu0 0.0
    %279 = vmatpush1.msra.mxu0 0.0
    %280 = vmatprep.subr.mxu0 0.0
    %281 = vmatpush1.msra.mxu0 0.0
    %282 = vmatprep.subr.mxu0 0.0
    %283 = vmatpush1.msra.mxu0 0.0
    %284 = vmatprep.subr.mxu0 0.0
    %285 = vmatpush1.msra.mxu0 0.0
    %286 = vmatprep.subr.mxu0 0.0
    %287 = vmatpush1.msra.mxu0 0.0
    %288 = vmatprep.subr.mxu0 0.0
    %289 = vmatpush1.msra.mxu0 0.0
    %290 = vmatprep.subr.mxu0 0.0
    %291 = vmatpush1.msra.mxu0 0.0
    %292 = vmatprep.subr.mxu0 0.0
    %293 = vmatpush1.msra.mxu0 0.0
    %294 = vmatprep.subr.mxu0 0.0
    %295 = vmatpush1.msra.mxu0 0.0
    %296 = vmatprep.mubr.f32.mxu0 0.0
    %297 = vmatmul.mubr.f32.gmra.mrb[0].mxu0 %v230
    %v298 = vpop.f32.mrb[0].mxu0
    %v299 = vadd.f32 %v227, %v298
    %v300 = vpop.f32.mrb[0].mxu0
    %301 = vdwg.mxu0
    %vm302 = vcmask 48128
    %303 = vst.msk [vmem:[#allocation5] sm:$0xff] %vm302, %v299
    // Predicated region
    $region34: #{tpu_custom_call.1} parent=1 // pred_check
      _
    $region35: #{tpu_custom_call.1} parent=1 // pred_check_branch
      %305 = sbr.rel (0) target = $region37
    $region36: #{tpu_custom_call.1} parent=1 // pred_region
      %s307 = ssub.s32 128, 128
      %308 = vsyncadd [#allocation4], %s307
      %s310 = sshll.u32 [#allocation5], 4
      %s311 = int_to_ptr.vmem [resolvable:$true] %s310
      %313 = dma.vmem_to_hbm [thread:$0]  %s311, 128, %s7, [#allocation4]
    $region37: #{tpu_custom_call.1} parent=1 // pred_fallthru
      _
    // Predicated region
    $region38: #{tpu_custom_call.1} parent=1 // pred_check
      _
    $region39: #{tpu_custom_call.1} parent=1 // pred_check_branch
      %315 = sbr.rel (0) target = $region41
    $region40: #{tpu_custom_call.1} parent=1 // pred_region
      %316 = dma.done [#allocation4], 128
    $region41: #{tpu_custom_call.1} parent=1 // pred_fallthru
      _
    %317 = vsyncpa [#allocation3], 1
    %318 = vsyncpa [#allocation4], 1

</llo_original>
